<compile_context>
chip_gen: v7x
topology: tpu7x:2x2x1
jax: 0.10.0
libtpu: 0.0.40
codegen_flags: <defaults>
</compile_context>

<pallas_src>
from functools import partial

import jax
import jax.numpy as jnp
from jax import lax
from jax.experimental import pallas as pl
from jax.experimental.pallas import tpu as pltpu


def make_lstm_kernel(Tc, Bp, HW, GW, GTP):
    """Kernel for static (time-chunk, padded-batch, hidden-lane) sizes.

    Grid: (T // Tc,) over time chunks ("arbitrary" -> sequential).
    """

    def kernel(emb_ref, wih_ref, whh_ref, b_ref, wfc_ref, bfc_ref,
               out_ref, pre_scr, h_scr, c_scr):
        # emb_ref : (Tc*Bp, E)   time-major embedded inputs for this chunk
        # wih_ref : (E, GTP)     input->gates weights, gate-blocked (i|f|g|o)
        # whh_ref : (HW, GTP)    hidden->gates weights, gate-blocked
        # b_ref   : (1, GTP)     b_ih + b_hh, gate-blocked
        # wfc_ref : (1, HW)      final linear weight
        # bfc_ref : (1, 1)       final linear bias
        # out_ref : (Bp, 1)      written only on the last chunk
        # pre_scr : (Tc*Bp, GTP) hoisted per-chunk input projection
        # h_scr,c_scr : (Bp, HW) persistent recurrent state across chunks

        t_chunk = pl.program_id(0)

        @pl.when(t_chunk == 0)
        def _init_state():
            h_scr[...] = jnp.zeros_like(h_scr)
            c_scr[...] = jnp.zeros_like(c_scr)

        # (1) one input projection for the whole chunk (fills MXU rows).
        pre_scr[...] = (jnp.dot(emb_ref[...], wih_ref[...],
                                preferred_element_type=jnp.float32)
                        + b_ref[...])

        # (2) recurrence: h/c are vreg loop carries; W_hh stays in VMEM and is
        #     fed to the MXU directly (no 256 KiB vreg hoist).
        def step(t, carry):
            h, c = carry
            row = pl.multiple_of(t * Bp, Bp)
            gates = (jnp.dot(h, whh_ref[...],
                             preferred_element_type=jnp.float32)
                     + pre_scr[pl.ds(row, Bp), :])            # (Bp, GTP)
            # dense gate slices, order i|f|g|o, width GW (=H when H<128)
            i = jax.nn.sigmoid(gates[:, 0 * GW:1 * GW])
            f = jax.nn.sigmoid(gates[:, 1 * GW:2 * GW])
            g = jnp.tanh(gates[:, 2 * GW:3 * GW])
            o = jax.nn.sigmoid(gates[:, 3 * GW:4 * GW])
            c_new = f * c + i * g
            h_new = o * jnp.tanh(c_new)
            return h_new, c_new

        h, c = lax.fori_loop(0, Tc, step, (h_scr[...], c_scr[...]),
                             unroll=min(Tc, 4))
        h_scr[...] = h
        c_scr[...] = c

        # final FC as a lane reduction, only after the last time chunk
        @pl.when(t_chunk == pl.num_programs(0) - 1)
        def _finalize():
            out_ref[...] = (jnp.sum(h * wfc_ref[...], axis=-1, keepdims=True)
                            + bfc_ref[...])

    return kernel


def _largest_divisor_at_most(n, target):
    d = max(1, min(n, target))
    while n % d:
        d -= 1
    return d


@partial(jax.jit, static_argnames=("time_chunk",))
def lstm_forward(tokens, params, *, time_chunk=32):
    emb_table = params["embedding"]              # (V, E)
    w_ih = params["w_ih"]                        # (4H, E)
    w_hh = params["w_hh"]                        # (4H, H)
    b_gates = params["b_ih"] + params["b_hh"]    # (4H,)
    w_fc = params["w_fc"]                        # (1, H)
    b_fc = params["b_fc"]                        # (1,)

    B, T = tokens.shape
    V, E = emb_table.shape
    H = w_hh.shape[1]

    LANE, SUB = 128, 8
    # Gate lane layout: dense (GW = H) when H < 128, per-gate 128-padded else.
    GW = H if H < LANE else ((H + LANE - 1) // LANE) * LANE
    HW = GW                                      # working hidden width (lanes)
    GTP = ((4 * GW + LANE - 1) // LANE) * LANE   # total gate lanes (padded)
    Bp = ((B + SUB - 1) // SUB) * SUB            # f32 sublane-padded batch
    Tc = _largest_divisor_at_most(T, time_chunk)
    n_chunks = T // Tc

    # ---- gate-blocked weight layouts, order i|f|g|o --------------------------
    def pack_gates_T(w):                         # (4H, K) -> (K, GTP)
        K = w.shape[1]
        w4 = w.reshape(4, H, K)
        w4p = jnp.zeros((4, GW, K), jnp.float32).at[:, :H, :].set(w4)
        wt = jnp.transpose(w4p, (2, 0, 1)).reshape(K, 4 * GW)
        return jnp.zeros((K, GTP), jnp.float32).at[:, :4 * GW].set(wt)

    wih_p = pack_gates_T(w_ih)                                          # (E, GTP)
    whh_p = (jnp.zeros((HW, GTP), jnp.float32)
             .at[:H, :].set(pack_gates_T(w_hh)))                        # (HW, GTP)
    b4 = jnp.zeros((4, GW), jnp.float32).at[:, :H].set(b_gates.reshape(4, H))
    b_p = (jnp.zeros((1, GTP), jnp.float32)
           .at[:, :4 * GW].set(b4.reshape(1, 4 * GW)))                  # (1, GTP)
    wfc_p = jnp.zeros((1, HW), jnp.float32).at[:, :H].set(w_fc)         # (1, HW)
    bfc_p = b_fc.reshape(1, 1)

    # ---- time-major embedding gather (reorder the int32 ids, not f32 data) ---
    # padded batch rows use token id 0 (valid id) and are sliced off below
    tokens_p = jnp.zeros((Bp, T), tokens.dtype).at[:B, :].set(tokens)
    ids_tm = tokens_p.T.reshape(T * Bp)                                 # (T*Bp,)
    emb_tm = jnp.take(emb_table, ids_tm, axis=0).astype(jnp.float32)    # (T*Bp, E)

    # ---- compiler params / cost estimate -------------------------------------
    vmem_need = 4 * (2 * Tc * Bp * E            # emb chunk, double-buffered
                     + Tc * Bp * GTP            # pre_scr
                     + 2 * (E * GTP + HW * GTP + GTP + HW + 1)   # weights
                     + 2 * Bp                   # out
                     + 2 * Bp * HW)             # h/c scratch
    vmem_limit = int(min(100 * 1024 * 1024, max(8 * 1024 * 1024, 2 * vmem_need)))

    cost = pl.CostEstimate(
        flops=2 * T * Bp * GTP * (E + HW) + 6 * T * Bp * HW,
        transcendentals=5 * T * Bp * HW,
        bytes_accessed=4 * (T * Bp * E + E * GTP + HW * GTP + GTP + HW + 1 + Bp),
    )

    out = pl.pallas_call(
        make_lstm_kernel(Tc, Bp, HW, GW, GTP),
        out_shape=jax.ShapeDtypeStruct((Bp, 1), jnp.float32),
        grid=(n_chunks,),
        in_specs=[
            pl.BlockSpec((Tc * Bp, E), lambda t: (t, 0)),     # emb chunk (streamed)
            pl.BlockSpec((E, GTP), lambda t: (0, 0)),         # W_ih
            pl.BlockSpec((HW, GTP), lambda t: (0, 0)),        # W_hh
            pl.BlockSpec((1, GTP), lambda t: (0, 0)),         # bias
            pl.BlockSpec((1, HW), lambda t: (0, 0)),          # fc weight
            pl.BlockSpec((1, 1), lambda t: (0, 0)),           # fc bias
        ],
        out_specs=pl.BlockSpec((Bp, 1), lambda t: (0, 0)),
        scratch_shapes=[
            pltpu.VMEM((Tc * Bp, GTP), jnp.float32),          # pre_scr
            pltpu.VMEM((Bp, HW), jnp.float32),                # h state
            pltpu.VMEM((Bp, HW), jnp.float32),                # c state
        ],
        compiler_params=pltpu.CompilerParams(
            dimension_semantics=("arbitrary",),
            vmem_limit_bytes=vmem_limit),
        cost_estimate=cost,
    )(emb_tm, wih_p, whh_p, b_p, wfc_p, bfc_p)

    return out[:B, 0]   # .squeeze() -> (B,)


def init_params(key, input_dim, embedding_dim, hidden_dim):
    """Deterministic init mirroring the PyTorch module's canonical shapes."""
    k = jax.random.split(key, 7)
    H, E, V = hidden_dim, embedding_dim, input_dim
    s = 1.0 / jnp.sqrt(jnp.float32(H))
    return {
        "embedding": jax.random.normal(k[0], (V, E), jnp.float32),
        "w_ih": jax.random.uniform(k[1], (4 * H, E), jnp.float32, -s, s),
        "w_hh": jax.random.uniform(k[2], (4 * H, H), jnp.float32, -s, s),
        "b_ih": jax.random.uniform(k[3], (4 * H,), jnp.float32, -s, s),
        "b_hh": jax.random.uniform(k[4], (4 * H,), jnp.float32, -s, s),
        "w_fc": jax.random.uniform(k[5], (1, H), jnp.float32, -s, s),
        "b_fc": jax.random.uniform(k[6], (1,), jnp.float32, -s, s),
    }


def reference_forward(tokens, params):
    """Pure-JAX reference of the same forward pass (correctness check)."""
    emb = jnp.take(params["embedding"], tokens, axis=0)   # (B, T, E)
    B, T, _ = emb.shape
    w_ih, w_hh = params["w_ih"], params["w_hh"]
    b = params["b_ih"] + params["b_hh"]
    H = w_hh.shape[1]
    h = jnp.zeros((B, H), jnp.float32)
    c = jnp.zeros((B, H), jnp.float32)
    for t in range(T):
        gates = emb[:, t, :] @ w_ih.T + h @ w_hh.T + b
        i = jax.nn.sigmoid(gates[:, 0 * H:1 * H])
        f = jax.nn.sigmoid(gates[:, 1 * H:2 * H])
        g = jnp.tanh(gates[:, 2 * H:3 * H])
        o = jax.nn.sigmoid(gates[:, 3 * H:4 * H])
        c = f * c + i * g
        h = o * jnp.tanh(c)
    return (h @ params["w_fc"].T + params["b_fc"])[:, 0]


if __name__ == "__main__":
    input_dim, embedding_dim, hidden_dim = 16, 32, 32
    batch, seq = 2, 8

    key = jax.random.PRNGKey(0)
    k_params, k_tokens = jax.random.split(key)
    params = init_params(k_params, input_dim, embedding_dim, hidden_dim)
    tokens = jax.random.randint(k_tokens, (batch, seq), 0, input_dim,
                                dtype=jnp.int32)

    # time_chunk=4 -> 2 grid steps at seq=8, exercising the chunked/persistent
    # state path (default chunk target is 32 for realistic sequence lengths).
    out = lstm_forward(tokens, params, time_chunk=4)
    out = jax.block_until_ready(out)

    ref = reference_forward(tokens, params)
    assert out.shape == (batch,)
    assert jnp.allclose(out, ref, atol=1e-4, rtol=1e-4)

    print("KERNEL_OK")
</pallas_src>

<mosaic_0001>
module attributes {stable_mosaic.version = 11 : i64} {
  func.func @kernel(%arg0: i32, %arg1: memref<32x32xf32, #tpu.memory_space<vmem>>, %arg2: memref<32x128xf32, #tpu.memory_space<vmem>>, %arg3: memref<32x128xf32, #tpu.memory_space<vmem>>, %arg4: memref<1x128xf32, #tpu.memory_space<vmem>>, %arg5: memref<1x32xf32, #tpu.memory_space<vmem>>, %arg6: memref<1x1xf32, #tpu.memory_space<vmem>>, %arg7: memref<8x1xf32, #tpu.memory_space<vmem>>, %arg8: memref<32x128xf32, #tpu.memory_space<vmem>>, %arg9: memref<8x32xf32, #tpu.memory_space<vmem>>, %arg10: memref<8x32xf32, #tpu.memory_space<vmem>>) attributes {dimension_semantics = [#tpu.dimension_semantics<arbitrary>], iteration_bounds = array<i64: 2>, scalar_prefetch = 0 : i64, scratch_operands = 3 : i64, tpu.core_type = #tpu.core_type<tc>, window_params = [{transform_indices = @transform_0, window_bounds = array<i64: 32, 32>}, {pipeline_mode = #tpu.pipeline_mode<synchronous>, transform_indices = @transform_1, window_bounds = array<i64: 32, 128>}, {pipeline_mode = #tpu.pipeline_mode<synchronous>, transform_indices = @transform_2, window_bounds = array<i64: 32, 128>}, {pipeline_mode = #tpu.pipeline_mode<synchronous>, transform_indices = @transform_3, window_bounds = array<i64: 1, 128>}, {pipeline_mode = #tpu.pipeline_mode<synchronous>, transform_indices = @transform_4, window_bounds = array<i64: 1, 32>}, {pipeline_mode = #tpu.pipeline_mode<synchronous>, transform_indices = @transform_5, window_bounds = array<i64: 1, 1>}, {pipeline_mode = #tpu.pipeline_mode<synchronous>, transform_indices = @transform_6, window_bounds = array<i64: 8, 1>}]} {
    %c0_i32 = arith.constant 0 : i32
    %0 = arith.cmpi eq, %arg0, %c0_i32 : i32
    %1 = arith.extui %0 : i1 to i32
    %c0_i32_0 = arith.constant 0 : i32
    %2 = arith.cmpi ne, %1, %c0_i32_0 : i32
    scf.if %2 {
      %cst_50 = arith.constant 0.000000e+00 : f32
      %145 = vector.broadcast %cst_50 : f32 to vector<8x32xf32>
      %c0_51 = arith.constant 0 : index
      %c0_52 = arith.constant 0 : index
      %146 = vector.load %arg9[%c0_51, %c0_52] : memref<8x32xf32, #tpu.memory_space<vmem>>, vector<8x32xf32>
      tpu.vector_store %arg9[%c0_51, %c0_52], %145 {strides = array<i32>} : memref<8x32xf32, #tpu.memory_space<vmem>>, vector<8x32xf32>,
      %cst_53 = arith.constant 0.000000e+00 : f32
      %147 = vector.broadcast %cst_53 : f32 to vector<8x32xf32>
      %c0_54 = arith.constant 0 : index
      %c0_55 = arith.constant 0 : index
      %148 = vector.load %arg10[%c0_54, %c0_55] : memref<8x32xf32, #tpu.memory_space<vmem>>, vector<8x32xf32>
      tpu.vector_store %arg10[%c0_54, %c0_55], %147 {strides = array<i32>} : memref<8x32xf32, #tpu.memory_space<vmem>>, vector<8x32xf32>,
    } else {
    }
    %c0 = arith.constant 0 : index
    %c0_1 = arith.constant 0 : index
    %3 = vector.load %arg1[%c0, %c0_1] : memref<32x32xf32, #tpu.memory_space<vmem>>, vector<32x32xf32>
    %c0_2 = arith.constant 0 : index
    %c0_3 = arith.constant 0 : index
    %4 = vector.load %arg2[%c0_2, %c0_3] : memref<32x128xf32, #tpu.memory_space<vmem>>, vector<32x128xf32>
    %cst = arith.constant dense<0.000000e+00> : vector<32x128xf32>
    %5 = tpu.matmul %3, %4, %cst {dimension_numbers = #tpu.dot_dimension_numbers<[1], [0], [0], [1], [0, 0, 1, 1], [], []>} : vector<32x32xf32>, vector<32x128xf32>, vector<32x128xf32> -> vector<32x128xf32>
    %c0_4 = arith.constant 0 : index
    %c0_5 = arith.constant 0 : index
    %6 = vector.load %arg4[%c0_4, %c0_5] : memref<1x128xf32, #tpu.memory_space<vmem>>, vector<1x128xf32>
    %7 = vector.broadcast %6 : vector<1x128xf32> to vector<32x128xf32>
    %8 = arith.addf %5, %7 : vector<32x128xf32>
    %c0_6 = arith.constant 0 : index
    %c0_7 = arith.constant 0 : index
    %9 = vector.load %arg8[%c0_6, %c0_7] : memref<32x128xf32, #tpu.memory_space<vmem>>, vector<32x128xf32>
    tpu.vector_store %arg8[%c0_6, %c0_7], %8 {strides = array<i32>} : memref<32x128xf32, #tpu.memory_space<vmem>>, vector<32x128xf32>,
    %c0_8 = arith.constant 0 : index
    %c0_9 = arith.constant 0 : index
    %10 = vector.load %arg9[%c0_8, %c0_9] : memref<8x32xf32, #tpu.memory_space<vmem>>, vector<8x32xf32>
    %c0_10 = arith.constant 0 : index
    %c0_11 = arith.constant 0 : index
    %11 = vector.load %arg10[%c0_10, %c0_11] : memref<8x32xf32, #tpu.memory_space<vmem>>, vector<8x32xf32>
    %c0_i32_12 = arith.constant 0 : i32
    %c8_i32 = arith.constant 8 : i32
    %12 = arith.muli %c0_i32_12, %c8_i32 : i32
    %13 = tpu.assume_multiple %12, 8 : i32
    %c0_13 = arith.constant 0 : index
    %c0_14 = arith.constant 0 : index
    %14 = vector.load %arg3[%c0_13, %c0_14] : memref<32x128xf32, #tpu.memory_space<vmem>>, vector<32x128xf32>
    %cst_15 = arith.constant dense<0.000000e+00> : vector<8x128xf32>
    %15 = tpu.matmul %10, %14, %cst_15 {dimension_numbers = #tpu.dot_dimension_numbers<[1], [0], [0], [1], [0, 0, 1, 1], [], []>} : vector<8x32xf32>, vector<32x128xf32>, vector<8x128xf32> -> vector<8x128xf32>
    %16 = arith.index_cast %13 : i32 to index
    %c0_16 = arith.constant 0 : index
    %17 = vector.load %arg8[%16, %c0_16] : memref<32x128xf32, #tpu.memory_space<vmem>>, vector<8x128xf32>
    %18 = arith.addf %15, %17 : vector<8x128xf32>
    %19 = vector.extract_strided_slice %18 {offsets = [0, 0], sizes = [8, 32], strides = [1, 1]} : vector<8x128xf32> to vector<8x32xf32>
    %20 = arith.negf %19 : vector<8x32xf32>
    %21 = math.exp %20 : vector<8x32xf32>
    %cst_17 = arith.constant 1.000000e+00 : f32
    %22 = vector.broadcast %cst_17 : f32 to vector<8x32xf32>
    %23 = arith.addf %22, %21 : vector<8x32xf32>
    %24 = arith.divf %22, %23 : vector<8x32xf32>
    %25 = vector.extract_strided_slice %18 {offsets = [0, 32], sizes = [8, 32], strides = [1, 1]} : vector<8x128xf32> to vector<8x32xf32>
    %26 = arith.negf %25 : vector<8x32xf32>
    %27 = math.exp %26 : vector<8x32xf32>
    %cst_18 = arith.constant 1.000000e+00 : f32
    %28 = vector.broadcast %cst_18 : f32 to vector<8x32xf32>
    %29 = arith.addf %28, %27 : vector<8x32xf32>
    %30 = arith.divf %28, %29 : vector<8x32xf32>
    %31 = vector.extract_strided_slice %18 {offsets = [0, 64], sizes = [8, 32], strides = [1, 1]} : vector<8x128xf32> to vector<8x32xf32>
    %32 = math.tanh %31 : vector<8x32xf32>
    %33 = vector.extract_strided_slice %18 {offsets = [0, 96], sizes = [8, 32], strides = [1, 1]} : vector<8x128xf32> to vector<8x32xf32>
    %34 = arith.negf %33 : vector<8x32xf32>
    %35 = math.exp %34 : vector<8x32xf32>
    %cst_19 = arith.constant 1.000000e+00 : f32
    %36 = vector.broadcast %cst_19 : f32 to vector<8x32xf32>
    %37 = arith.addf %36, %35 : vector<8x32xf32>
    %38 = arith.divf %36, %37 : vector<8x32xf32>
    %39 = arith.mulf %30, %11 : vector<8x32xf32>
    %40 = arith.mulf %24, %32 : vector<8x32xf32>
    %41 = arith.addf %39, %40 : vector<8x32xf32>
    %42 = math.tanh %41 : vector<8x32xf32>
    %43 = arith.mulf %38, %42 : vector<8x32xf32>
    %c1_i32 = arith.constant 1 : i32
    %c8_i32_20 = arith.constant 8 : i32
    %44 = arith.muli %c1_i32, %c8_i32_20 : i32
    %45 = tpu.assume_multiple %44, 8 : i32
    %c0_21 = arith.constant 0 : index
    %c0_22 = arith.constant 0 : index
    %46 = vector.load %arg3[%c0_21, %c0_22] : memref<32x128xf32, #tpu.memory_space<vmem>>, vector<32x128xf32>
    %cst_23 = arith.constant dense<0.000000e+00> : vector<8x128xf32>
    %47 = tpu.matmul %43, %46, %cst_23 {dimension_numbers = #tpu.dot_dimension_numbers<[1], [0], [0], [1], [0, 0, 1, 1], [], []>} : vector<8x32xf32>, vector<32x128xf32>, vector<8x128xf32> -> vector<8x128xf32>
    %48 = arith.index_cast %45 : i32 to index
    %c0_24 = arith.constant 0 : index
    %49 = vector.load %arg8[%48, %c0_24] : memref<32x128xf32, #tpu.memory_space<vmem>>, vector<8x128xf32>
    %50 = arith.addf %47, %49 : vector<8x128xf32>
    %51 = vector.extract_strided_slice %50 {offsets = [0, 0], sizes = [8, 32], strides = [1, 1]} : vector<8x128xf32> to vector<8x32xf32>
    %52 = arith.negf %51 : vector<8x32xf32>
    %53 = math.exp %52 : vector<8x32xf32>
    %cst_25 = arith.constant 1.000000e+00 : f32
    %54 = vector.broadcast %cst_25 : f32 to vector<8x32xf32>
    %55 = arith.addf %54, %53 : vector<8x32xf32>
    %56 = arith.divf %54, %55 : vector<8x32xf32>
    %57 = vector.extract_strided_slice %50 {offsets = [0, 32], sizes = [8, 32], strides = [1, 1]} : vector<8x128xf32> to vector<8x32xf32>
    %58 = arith.negf %57 : vector<8x32xf32>
    %59 = math.exp %58 : vector<8x32xf32>
    %cst_26 = arith.constant 1.000000e+00 : f32
    %60 = vector.broadcast %cst_26 : f32 to vector<8x32xf32>
    %61 = arith.addf %60, %59 : vector<8x32xf32>
    %62 = arith.divf %60, %61 : vector<8x32xf32>
    %63 = vector.extract_strided_slice %50 {offsets = [0, 64], sizes = [8, 32], strides = [1, 1]} : vector<8x128xf32> to vector<8x32xf32>
    %64 = math.tanh %63 : vector<8x32xf32>
    %65 = vector.extract_strided_slice %50 {offsets = [0, 96], sizes = [8, 32], strides = [1, 1]} : vector<8x128xf32> to vector<8x32xf32>
    %66 = arith.negf %65 : vector<8x32xf32>
    %67 = math.exp %66 : vector<8x32xf32>
    %cst_27 = arith.constant 1.000000e+00 : f32
    %68 = vector.broadcast %cst_27 : f32 to vector<8x32xf32>
    %69 = arith.addf %68, %67 : vector<8x32xf32>
    %70 = arith.divf %68, %69 : vector<8x32xf32>
    %71 = arith.mulf %62, %41 : vector<8x32xf32>
    %72 = arith.mulf %56, %64 : vector<8x32xf32>
    %73 = arith.addf %71, %72 : vector<8x32xf32>
    %74 = math.tanh %73 : vector<8x32xf32>
    %75 = arith.mulf %70, %74 : vector<8x32xf32>
    %c2_i32 = arith.constant 2 : i32
    %c8_i32_28 = arith.constant 8 : i32
    %76 = arith.muli %c2_i32, %c8_i32_28 : i32
    %77 = tpu.assume_multiple %76, 8 : i32
    %c0_29 = arith.constant 0 : index
    %c0_30 = arith.constant 0 : index
    %78 = vector.load %arg3[%c0_29, %c0_30] : memref<32x128xf32, #tpu.memory_space<vmem>>, vector<32x128xf32>
    %cst_31 = arith.constant dense<0.000000e+00> : vector<8x128xf32>
    %79 = tpu.matmul %75, %78, %cst_31 {dimension_numbers = #tpu.dot_dimension_numbers<[1], [0], [0], [1], [0, 0, 1, 1], [], []>} : vector<8x32xf32>, vector<32x128xf32>, vector<8x128xf32> -> vector<8x128xf32>
    %80 = arith.index_cast %77 : i32 to index
    %c0_32 = arith.constant 0 : index
    %81 = vector.load %arg8[%80, %c0_32] : memref<32x128xf32, #tpu.memory_space<vmem>>, vector<8x128xf32>
    %82 = arith.addf %79, %81 : vector<8x128xf32>
    %83 = vector.extract_strided_slice %82 {offsets = [0, 0], sizes = [8, 32], strides = [1, 1]} : vector<8x128xf32> to vector<8x32xf32>
    %84 = arith.negf %83 : vector<8x32xf32>
    %85 = math.exp %84 : vector<8x32xf32>
    %cst_33 = arith.constant 1.000000e+00 : f32
    %86 = vector.broadcast %cst_33 : f32 to vector<8x32xf32>
    %87 = arith.addf %86, %85 : vector<8x32xf32>
    %88 = arith.divf %86, %87 : vector<8x32xf32>
    %89 = vector.extract_strided_slice %82 {offsets = [0, 32], sizes = [8, 32], strides = [1, 1]} : vector<8x128xf32> to vector<8x32xf32>
    %90 = arith.negf %89 : vector<8x32xf32>
    %91 = math.exp %90 : vector<8x32xf32>
    %cst_34 = arith.constant 1.000000e+00 : f32
    %92 = vector.broadcast %cst_34 : f32 to vector<8x32xf32>
    %93 = arith.addf %92, %91 : vector<8x32xf32>
    %94 = arith.divf %92, %93 : vector<8x32xf32>
    %95 = vector.extract_strided_slice %82 {offsets = [0, 64], sizes = [8, 32], strides = [1, 1]} : vector<8x128xf32> to vector<8x32xf32>
    %96 = math.tanh %95 : vector<8x32xf32>
    %97 = vector.extract_strided_slice %82 {offsets = [0, 96], sizes = [8, 32], strides = [1, 1]} : vector<8x128xf32> to vector<8x32xf32>
    %98 = arith.negf %97 : vector<8x32xf32>
    %99 = math.exp %98 : vector<8x32xf32>
    %cst_35 = arith.constant 1.000000e+00 : f32
    %100 = vector.broadcast %cst_35 : f32 to vector<8x32xf32>
    %101 = arith.addf %100, %99 : vector<8x32xf32>
    %102 = arith.divf %100, %101 : vector<8x32xf32>
    %103 = arith.mulf %94, %73 : vector<8x32xf32>
    %104 = arith.mulf %88, %96 : vector<8x32xf32>
    %105 = arith.addf %103, %104 : vector<8x32xf32>
    %106 = math.tanh %105 : vector<8x32xf32>
    %107 = arith.mulf %102, %106 : vector<8x32xf32>
    %c3_i32 = arith.constant 3 : i32
    %c8_i32_36 = arith.constant 8 : i32
    %108 = arith.muli %c3_i32, %c8_i32_36 : i32
    %109 = tpu.assume_multiple %108, 8 : i32
    %c0_37 = arith.constant 0 : index
    %c0_38 = arith.constant 0 : index
    %110 = vector.load %arg3[%c0_37, %c0_38] : memref<32x128xf32, #tpu.memory_space<vmem>>, vector<32x128xf32>
    %cst_39 = arith.constant dense<0.000000e+00> : vector<8x128xf32>
    %111 = tpu.matmul %107, %110, %cst_39 {dimension_numbers = #tpu.dot_dimension_numbers<[1], [0], [0], [1], [0, 0, 1, 1], [], []>} : vector<8x32xf32>, vector<32x128xf32>, vector<8x128xf32> -> vector<8x128xf32>
    %112 = arith.index_cast %109 : i32 to index
    %c0_40 = arith.constant 0 : index
    %113 = vector.load %arg8[%112, %c0_40] : memref<32x128xf32, #tpu.memory_space<vmem>>, vector<8x128xf32>
    %114 = arith.addf %111, %113 : vector<8x128xf32>
    %115 = vector.extract_strided_slice %114 {offsets = [0, 0], sizes = [8, 32], strides = [1, 1]} : vector<8x128xf32> to vector<8x32xf32>
    %116 = arith.negf %115 : vector<8x32xf32>
    %117 = math.exp %116 : vector<8x32xf32>
    %cst_41 = arith.constant 1.000000e+00 : f32
    %118 = vector.broadcast %cst_41 : f32 to vector<8x32xf32>
    %119 = arith.addf %118, %117 : vector<8x32xf32>
    %120 = arith.divf %118, %119 : vector<8x32xf32>
    %121 = vector.extract_strided_slice %114 {offsets = [0, 32], sizes = [8, 32], strides = [1, 1]} : vector<8x128xf32> to vector<8x32xf32>
    %122 = arith.negf %121 : vector<8x32xf32>
    %123 = math.exp %122 : vector<8x32xf32>
    %cst_42 = arith.constant 1.000000e+00 : f32
    %124 = vector.broadcast %cst_42 : f32 to vector<8x32xf32>
    %125 = arith.addf %124, %123 : vector<8x32xf32>
    %126 = arith.divf %124, %125 : vector<8x32xf32>
    %127 = vector.extract_strided_slice %114 {offsets = [0, 64], sizes = [8, 32], strides = [1, 1]} : vector<8x128xf32> to vector<8x32xf32>
    %128 = math.tanh %127 : vector<8x32xf32>
    %129 = vector.extract_strided_slice %114 {offsets = [0, 96], sizes = [8, 32], strides = [1, 1]} : vector<8x128xf32> to vector<8x32xf32>
    %130 = arith.negf %129 : vector<8x32xf32>
    %131 = math.exp %130 : vector<8x32xf32>
    %cst_43 = arith.constant 1.000000e+00 : f32
    %132 = vector.broadcast %cst_43 : f32 to vector<8x32xf32>
    %133 = arith.addf %132, %131 : vector<8x32xf32>
    %134 = arith.divf %132, %133 : vector<8x32xf32>
    %135 = arith.mulf %126, %105 : vector<8x32xf32>
    %136 = arith.mulf %120, %128 : vector<8x32xf32>
    %137 = arith.addf %135, %136 : vector<8x32xf32>
    %138 = math.tanh %137 : vector<8x32xf32>
    %139 = arith.mulf %134, %138 : vector<8x32xf32>
    %c4_i32 = arith.constant 4 : i32
    %c0_44 = arith.constant 0 : index
    %c0_45 = arith.constant 0 : index
    %140 = vector.load %arg9[%c0_44, %c0_45] : memref<8x32xf32, #tpu.memory_space<vmem>>, vector<8x32xf32>
    tpu.vector_store %arg9[%c0_44, %c0_45], %139 {strides = array<i32>} : memref<8x32xf32, #tpu.memory_space<vmem>>, vector<8x32xf32>,
    %c0_46 = arith.constant 0 : index
    %c0_47 = arith.constant 0 : index
    %141 = vector.load %arg10[%c0_46, %c0_47] : memref<8x32xf32, #tpu.memory_space<vmem>>, vector<8x32xf32>
    tpu.vector_store %arg10[%c0_46, %c0_47], %137 {strides = array<i32>} : memref<8x32xf32, #tpu.memory_space<vmem>>, vector<8x32xf32>,
    %c1_i32_48 = arith.constant 1 : i32
    %142 = arith.cmpi eq, %arg0, %c1_i32_48 : i32
    %143 = arith.extui %142 : i1 to i32
    %c0_i32_49 = arith.constant 0 : i32
    %144 = arith.cmpi ne, %143, %c0_i32_49 : i32
    scf.if %144 {
      %c0_50 = arith.constant 0 : index
      %c0_51 = arith.constant 0 : index
      %145 = vector.load %arg5[%c0_50, %c0_51] : memref<1x32xf32, #tpu.memory_space<vmem>>, vector<1x32xf32>
      %146 = vector.broadcast %145 : vector<1x32xf32> to vector<8x32xf32>
      %147 = arith.mulf %139, %146 : vector<8x32xf32>
      %cst_52 = arith.constant dense<0.000000e+00> : vector<8xf32>
      %148 = vector.multi_reduction <add>, %147, %cst_52 [1] : vector<8x32xf32> to vector<8xf32>
      %149 = vector.shape_cast %148 : vector<8xf32> to vector<8x1xf32>
      %c0_53 = arith.constant 0 : index
      %c0_54 = arith.constant 0 : index
      %150 = vector.load %arg6[%c0_53, %c0_54] : memref<1x1xf32, #tpu.memory_space<vmem>>, vector<1x1xf32>
      %151 = vector.broadcast %150 : vector<1x1xf32> to vector<8x1xf32>
      %152 = arith.addf %149, %151 : vector<8x1xf32>
      %c0_55 = arith.constant 0 : index
      %c0_56 = arith.constant 0 : index
      %153 = vector.load %arg7[%c0_55, %c0_56] : memref<8x1xf32, #tpu.memory_space<vmem>>, vector<8x1xf32>
      tpu.vector_store %arg7[%c0_55, %c0_56], %152 {strides = array<i32>} : memref<8x1xf32, #tpu.memory_space<vmem>>, vector<8x1xf32>,
    } else {
    }
    return
  }
  func.func @transform_0(%arg0: i32) -> (i32, i32) {
    %c0_i32 = arith.constant 0 : i32
    %c0_i32_0 = arith.constant 0 : i32
    return %arg0, %c0_i32 : i32, i32
  }
  func.func @transform_1(%arg0: i32) -> (i32, i32) {
    %c0_i32 = arith.constant 0 : i32
    %c0_i32_0 = arith.constant 0 : i32
    %c0_i32_1 = arith.constant 0 : i32
    return %c0_i32, %c0_i32_0 : i32, i32
  }
  func.func @transform_2(%arg0: i32) -> (i32, i32) {
    %c0_i32 = arith.constant 0 : i32
    %c0_i32_0 = arith.constant 0 : i32
    %c0_i32_1 = arith.constant 0 : i32
    return %c0_i32, %c0_i32_0 : i32, i32
  }
  func.func @transform_3(%arg0: i32) -> (i32, i32) {
    %c0_i32 = arith.constant 0 : i32
    %c0_i32_0 = arith.constant 0 : i32
    %c0_i32_1 = arith.constant 0 : i32
    return %c0_i32, %c0_i32_0 : i32, i32
  }
  func.func @transform_4(%arg0: i32) -> (i32, i32) {
    %c0_i32 = arith.constant 0 : i32
    %c0_i32_0 = arith.constant 0 : i32
    %c0_i32_1 = arith.constant 0 : i32
    return %c0_i32, %c0_i32_0 : i32, i32
  }
  func.func @transform_5(%arg0: i32) -> (i32, i32) {
    %c0_i32 = arith.constant 0 : i32
    %c0_i32_0 = arith.constant 0 : i32
    %c0_i32_1 = arith.constant 0 : i32
    return %c0_i32, %c0_i32_0 : i32, i32
  }
  func.func @transform_6(%arg0: i32) -> (i32, i32) {
    %c0_i32 = arith.constant 0 : i32
    %c0_i32_0 = arith.constant 0 : i32
    %c0_i32_1 = arith.constant 0 : i32
    return %c0_i32, %c0_i32_0 : i32, i32
  }
}

</mosaic_0001>

<llo_original>
// kernel: lstm_forward.1
$region0: #{lstm_forward.1}
  #allocation0 [shape = 'u32[]', space=smem, size = 0x4, offset = 0x4, fixed_abs, tag = 'smem constant byte address 0x4 - core index']
  #allocation1 [shape = 'u32[144,128]{1,0:T(1,128)}', space=vmem, size = 0x12000, scoped, tag = 'internal scratch']
  #allocation2 [shape = 'f32[32,128]{1,0:T(8,128)}', space=vmem, size = 0x4000, scoped, tag = 'scratch operand']
  #allocation3 [shape = 'f32[8,32]{1,0:T(8,128)}', space=vmem, size = 0x1000, scoped, tag = 'scratch operand']
  #allocation4 [shape = 'f32[8,32]{1,0:T(8,128)}', space=vmem, size = 0x1000, scoped, tag = 'scratch operand']
  #allocation5 [shape = 'f32[1,1]{1,0:T(1,128)S(1)}', space=vmem, size = 0x200, scoped, tag = 'scoped memory for lstm_forward.1']
  %s0 = inlined_call_operand.vmem [shape: f32[64,32], index: 0, kind: input, shape index: {}]
  %s1 = inlined_call_operand.vmem [shape: f32[32,128], index: 1, kind: input, shape index: {}]
  %s2 = inlined_call_operand.vmem [shape: f32[32,128], index: 2, kind: input, shape index: {}]
  %s3 = inlined_call_operand.vmem [shape: f32[1,128], index: 3, kind: input, shape index: {}]
  %s4 = inlined_call_operand.vmem [shape: f32[1,32], index: 4, kind: input, shape index: {}]
  %s5 = inlined_call_operand.<no memory space> [shape: f32[1,1], index: 5, kind: input, shape index: {}]
  %s6 = inlined_call_operand.vmem [shape: f32[8,1], index: 6, kind: output, shape index: {}]
  %s7 = sld [smem:[#allocation0]]
  $region65: #{lstm_forward.1} parent=0
    _
  %s9 = ssub.s32 1, %s7
  %s10 = scalar_select 0, %s9, %s7
  %v11 = vstv %s5
  %12 = vst [vmem:[#allocation5] sm:$0x1] %v11
  loop: start=0, step=1, limit=4
  $region2: #{lstm_forward.1} parent=0 // loop_pre_header
    _
  $region3: #{lstm_forward.1} parent=0 // loop_header
    %s14 = sphi 0, %s18
    %p15 = scmp.ge.s32.totalorder %s14, 4
    %s24 = sphi 0, %s26
    %s27 = sphi 0, %s24
    %s28 = sphi 0, %s27
    %s44 = sphi 0, %s28
    %s48 = sphi 0, %s48
    %s50 = sphi 0, %s48
    %s51 = sphi 0, %s50
    %s65 = sphi 0, %s51
    %s69 = sphi 0, %s69
    %s71 = sphi 0, %s69
    %s72 = sphi 0, %s71
    %s86 = sphi 0, %s72
    %s90 = sphi 0, %s90
    %s92 = sphi 0, %s90
    %s93 = sphi 0, %s92
    %s107 = sphi 0, %s93
    %s111 = sphi 0, %s111
    %s113 = sphi 0, %s111
    %s114 = sphi 0, %s113
    %s128 = sphi 0, %s114
    %s132 = sphi 0, %s132
    %s134 = sphi 0, %s132
    %s135 = sphi 0, %s134
    %s149 = sphi 0, %s135
    %s153 = sphi 0, %s153
    %s155 = sphi 0, %s153
    %s156 = sphi 0, %s155
    %s170 = sphi 0, %s156
  $region4: #{lstm_forward.1} parent=0 // loop_header_branch
    %17 = sbr.rel (%p15) target = $region8
  $region5: #{lstm_forward.1} parent=0 // loop_body
    %s19 = ssub.s32 %s14, 1
    %s20 = ssub.s32 %s14, 2
    %s21 = sadd.s32 %s14, 1
    %s22 = ssub.s32 %s14, %s21
    %p23 = scmp.eq.s32.totalorder %s22, 0
    %s25 = sadd.s32 %s24, 1
    %s26 = scalar_select %p23, %s24, %s25
    %p29 = pneg %p23
    %p30 = scmp.eq.s32.totalorder %s14, 1
    %p31 = por %p29, %p30
    %p32 = scmp.ne.s32.totalorder %s24, %s27
    %p33 = scmp.eq.s32.totalorder %s14, 0
    %p34 = por %p32, %p33
    %p35 = scmp.ne.s32.totalorder %s24, %s27
    %p36 = scmp.eq.s32.totalorder %s19, 1
    %p37 = por %p35, %p36
    %p38 = scmp.ne.s32.totalorder %s27, %s28
    %p39 = scmp.eq.s32.totalorder %s19, 0
    %p40 = por %p38, %p39
    %p41 = scmp.ne.s32.totalorder %s27, %s28
    %p42 = scmp.eq.s32.totalorder %s20, 1
    %p43 = por %p41, %p42
    %p45 = scmp.ne.s32.totalorder %s28, %s44
    %p46 = scmp.eq.s32.totalorder %s20, 0
    %p47 = por %p45, %p46
    %s49 = sadd.s32 %s48, 1
    %p52 = scmp.eq.s32.totalorder %s14, 1
    %p53 = scmp.ne.s32.totalorder %s48, %s50
    %p54 = scmp.eq.s32.totalorder %s14, 0
    %p55 = por %p53, %p54
    %p56 = scmp.ne.s32.totalorder %s48, %s50
    %p57 = scmp.eq.s32.totalorder %s19, 1
    %p58 = por %p56, %p57
    %p59 = scmp.ne.s32.totalorder %s50, %s51
    %p60 = scmp.eq.s32.totalorder %s19, 0
    %p61 = por %p59, %p60
    %p62 = scmp.ne.s32.totalorder %s50, %s51
    %p63 = scmp.eq.s32.totalorder %s20, 1
    %p64 = por %p62, %p63
    %p66 = scmp.ne.s32.totalorder %s51, %s65
    %p67 = scmp.eq.s32.totalorder %s20, 0
    %p68 = por %p66, %p67
    %s70 = sadd.s32 %s69, 1
    %p73 = scmp.eq.s32.totalorder %s14, 1
    %p74 = scmp.ne.s32.totalorder %s69, %s71
    %p75 = scmp.eq.s32.totalorder %s14, 0
    %p76 = por %p74, %p75
    %p77 = scmp.ne.s32.totalorder %s69, %s71
    %p78 = scmp.eq.s32.totalorder %s19, 1
    %p79 = por %p77, %p78
    %p80 = scmp.ne.s32.totalorder %s71, %s72
    %p81 = scmp.eq.s32.totalorder %s19, 0
    %p82 = por %p80, %p81
    %p83 = scmp.ne.s32.totalorder %s71, %s72
    %p84 = scmp.eq.s32.totalorder %s20, 1
    %p85 = por %p83, %p84
    %p87 = scmp.ne.s32.totalorder %s72, %s86
    %p88 = scmp.eq.s32.totalorder %s20, 0
    %p89 = por %p87, %p88
    %s91 = sadd.s32 %s90, 1
    %p94 = scmp.eq.s32.totalorder %s14, 1
    %p95 = scmp.ne.s32.totalorder %s90, %s92
    %p96 = scmp.eq.s32.totalorder %s14, 0
    %p97 = por %p95, %p96
    %p98 = scmp.ne.s32.totalorder %s90, %s92
    %p99 = scmp.eq.s32.totalorder %s19, 1
    %p100 = por %p98, %p99
    %p101 = scmp.ne.s32.totalorder %s92, %s93
    %p102 = scmp.eq.s32.totalorder %s19, 0
    %p103 = por %p101, %p102
    %p104 = scmp.ne.s32.totalorder %s92, %s93
    %p105 = scmp.eq.s32.totalorder %s20, 1
    %p106 = por %p104, %p105
    %p108 = scmp.ne.s32.totalorder %s93, %s107
    %p109 = scmp.eq.s32.totalorder %s20, 0
    %p110 = por %p108, %p109
    %s112 = sadd.s32 %s111, 1
    %p115 = scmp.eq.s32.totalorder %s14, 1
    %p116 = scmp.ne.s32.totalorder %s111, %s113
    %p117 = scmp.eq.s32.totalorder %s14, 0
    %p118 = por %p116, %p117
    %p119 = scmp.ne.s32.totalorder %s111, %s113
    %p120 = scmp.eq.s32.totalorder %s19, 1
    %p121 = por %p119, %p120
    %p122 = scmp.ne.s32.totalorder %s113, %s114
    %p123 = scmp.eq.s32.totalorder %s19, 0
    %p124 = por %p122, %p123
    %p125 = scmp.ne.s32.totalorder %s113, %s114
    %p126 = scmp.eq.s32.totalorder %s20, 1
    %p127 = por %p125, %p126
    %p129 = scmp.ne.s32.totalorder %s114, %s128
    %p130 = scmp.eq.s32.totalorder %s20, 0
    %p131 = por %p129, %p130
    %s133 = sadd.s32 %s132, 1
    %p136 = scmp.eq.s32.totalorder %s14, 1
    %p137 = scmp.ne.s32.totalorder %s132, %s134
    %p138 = scmp.eq.s32.totalorder %s14, 0
    %p139 = por %p137, %p138
    %p140 = scmp.ne.s32.totalorder %s132, %s134
    %p141 = scmp.eq.s32.totalorder %s19, 1
    %p142 = por %p140, %p141
    %p143 = scmp.ne.s32.totalorder %s134, %s135
    %p144 = scmp.eq.s32.totalorder %s19, 0
    %p145 = por %p143, %p144
    %p146 = scmp.ne.s32.totalorder %s134, %s135
    %p147 = scmp.eq.s32.totalorder %s20, 1
    %p148 = por %p146, %p147
    %p150 = scmp.ne.s32.totalorder %s135, %s149
    %p151 = scmp.eq.s32.totalorder %s20, 0
    %p152 = por %p150, %p151
    %s154 = sadd.s32 %s153, 1
    %p157 = scmp.eq.s32.totalorder %s14, 1
    %p158 = scmp.ne.s32.totalorder %s153, %s155
    %p159 = scmp.eq.s32.totalorder %s14, 0
    %p160 = por %p158, %p159
    %p161 = scmp.ne.s32.totalorder %s153, %s155
    %p162 = scmp.eq.s32.totalorder %s19, 1
    %p163 = por %p161, %p162
    %p164 = scmp.ne.s32.totalorder %s155, %s156
    %p165 = scmp.eq.s32.totalorder %s19, 0
    %p166 = por %p164, %p165
    %p167 = scmp.ne.s32.totalorder %s155, %s156
    %p168 = scmp.eq.s32.totalorder %s20, 1
    %p169 = por %p167, %p168
    %p171 = scmp.ne.s32.totalorder %s156, %s170
    %p172 = scmp.eq.s32.totalorder %s20, 0
    %p173 = por %p171, %p172
    %p174 = scmp.le.s32.totalorder 1, %s14
    %p175 = scmp.lt.s32.totalorder %s14, 3
    %p176 = pnand %p174, %p175
    %p177 = pneg %p176
    // Predicated region
    $region9: #{lstm_forward.1} parent=5 // pred_check
      _
    $region10: #{lstm_forward.1} parent=5 // pred_check_branch
      %179 = sbr.rel (%p176) target = $region12
    $region11: #{lstm_forward.1} parent=5 // pred_region
      %s180 = ssub.s32 %s14, 1
      // Predicated region
      $region13: #{lstm_forward.1} parent=11 // pred_check
        %p181 = pneg %p61
      $region14: #{lstm_forward.1} parent=11 // pred_check_branch
        %183 = sbr.rel (%p181) target = $region16
      $region15: #{lstm_forward.1} parent=11 // pred_region
        _
      $region16: #{lstm_forward.1} parent=11 // pred_fallthru
        _
      // Predicated region
      $region17: #{lstm_forward.1} parent=11 // pred_check
        %p184 = pneg %p82
      $region18: #{lstm_forward.1} parent=11 // pred_check_branch
        %186 = sbr.rel (%p184) target = $region20
      $region19: #{lstm_forward.1} parent=11 // pred_region
        _
      $region20: #{lstm_forward.1} parent=11 // pred_fallthru
        _
      // Predicated region
      $region21: #{lstm_forward.1} parent=11 // pred_check
        %p187 = pneg %p103
      $region22: #{lstm_forward.1} parent=11 // pred_check_branch
        %189 = sbr.rel (%p187) target = $region24
      $region23: #{lstm_forward.1} parent=11 // pred_region
        _
      $region24: #{lstm_forward.1} parent=11 // pred_fallthru
        _
      // Predicated region
      $region25: #{lstm_forward.1} parent=11 // pred_check
        %p190 = pneg %p124
      $region26: #{lstm_forward.1} parent=11 // pred_check_branch
        %192 = sbr.rel (%p190) target = $region28
      $region27: #{lstm_forward.1} parent=11 // pred_region
        _
      $region28: #{lstm_forward.1} parent=11 // pred_fallthru
        _
      // Predicated region
      $region29: #{lstm_forward.1} parent=11 // pred_check
        %p193 = pneg %p145
      $region30: #{lstm_forward.1} parent=11 // pred_check_branch
        %195 = sbr.rel (%p193) target = $region32
      $region31: #{lstm_forward.1} parent=11 // pred_region
        _
      $region32: #{lstm_forward.1} parent=11 // pred_fallthru
        _
    $region12: #{lstm_forward.1} parent=5 // pred_fallthru
      _
    %p196 = scmp.lt.s32.totalorder %s14, 2
    // Predicated region
    $region33: #{lstm_forward.1} parent=5 // pred_check
      %p197 = pneg %p196
    $region34: #{lstm_forward.1} parent=5 // pred_check_branch
      %199 = sbr.rel (%p197) target = $region36
    $region35: #{lstm_forward.1} parent=5 // pred_region
      // Predicated region
      $region37: #{lstm_forward.1} parent=35 // pred_check
        %p200 = pneg %p34
      $region38: #{lstm_forward.1} parent=35 // pred_check_branch
        %202 = sbr.rel (%p200) target = $region40
      $region39: #{lstm_forward.1} parent=35 // pred_region
        %s203 = smul.u32 4, %s14
        %p204 = scmp.lt.s32.totalorder %s203, 7
        %s205 = scalar_select %p204, %s203, 7
        %s206 = smul.addr %s205, 8
        %s207 = scalar_lea.vmem %s0, %s206
        %s208 = smul.u32 4, %s14
      $region40: #{lstm_forward.1} parent=35 // pred_fallthru
        _
    $region36: #{lstm_forward.1} parent=5 // pred_fallthru
      _
    %p209 = scmp.le.s32.totalorder 1, %s14
    %p210 = scmp.lt.s32.totalorder %s14, 3
    %p211 = pnand %p209, %p210
    %p212 = pneg %p211
    // Predicated region
    $region41: #{lstm_forward.1} parent=5 // pred_check
      _
    $region42: #{lstm_forward.1} parent=5 // pred_check_branch
      %214 = sbr.rel (%p211) target = $region44
    $region43: #{lstm_forward.1} parent=5 // pred_region
      %s215 = ssub.s32 %s14, 1
      %s216 = smul.u32 4, %s19
      %p217 = scmp.lt.s32.totalorder %s216, 7
      %s218 = scalar_select %p217, %s216, 7
      %s219 = smul.addr %s218, 8
      %s220 = scalar_lea.vmem %s0, %s219
      %p221 = pneg %p40
      %p222 = pneg %p37
      %p223 = pneg %p61
      %p224 = pneg %p58
      %p225 = pneg %p82
      %p226 = pneg %p79
      %p227 = pneg %p103
      %p228 = pneg %p100
      %p229 = pneg %p124
      %p230 = pneg %p121
      %p231 = pneg %p145
      %p232 = pneg %p142
      %p233 = pneg %p166
      %p234 = pneg %p163
      %s235 = smul.u32 4, %s19
      %p236 = scmp.lt.s32.totalorder %s235, 7
      %s237 = scalar_select %p236, %s235, 7
      %s238 = smul.addr %s237, 8
      %s239 = scalar_lea.vmem %s0, %s238
      %s240 = smul.u32 4, %s19
      %p241 = scmp.eq.s32.totalorder %s19, 0
      // Predicated region
      $region45: #{lstm_forward.1} parent=43 // pred_check
        %p242 = pneg %p241
      $region46: #{lstm_forward.1} parent=43 // pred_check_branch
        %244 = sbr.rel (%p242) target = $region48
      $region47: #{lstm_forward.1} parent=43 // pred_region
        %vm245 = vcmask 261120
        %246 = vst.msk [vmem:[#allocation3] sm:$0xff] %vm245, 0.0
        %247 = vst.msk [vmem:[#allocation4] sm:$0xff] %vm245, 0.0
      $region48: #{lstm_forward.1} parent=43 // pred_fallthru
        _
      %v248 = vld [vmem:[%s239] sm:$0xff]
      %v249 = vld [vmem:[%s239 + $0x8] sm:$0xff]
      %v250 = vld [vmem:[%s239 + $0x10] sm:$0xff]
      %v251 = vld [vmem:[%s239 + $0x18] sm:$0xff]
      %v252 = vld [vmem:[%s1] sm:$0xff]
      %v253 = vld [vmem:[%s1 + $0x8] sm:$0xff]
      %v254 = vld [vmem:[%s1 + $0x10] sm:$0xff]
      %v255 = vld [vmem:[%s1 + $0x18] sm:$0xff]
      %v256 = vld [vmem:[%s3] sm:$0x1]
      %v258 = vlaneseq
      %v259 = vshrl.u32 %v258, 7
      %v260 = vsub.s32 0, %v259
      %v261 = vrot.slane %v256, %v260
      %vm263 = vcmask 261120
      %v265 = vsel %vm263, %v248, 0
      %v268 = vsel %vm263, %v249, 0
      %v271 = vsel %vm263, %v250, 0
      %v274 = vsel %vm263, %v251, 0
      %276 = vmatprep.subr.mxu0 0.0
      %277 = vmatpush1.msra.mxu0 %v252
      %278 = vmatprep.subr.mxu0 0.0
      %279 = vmatpush1.msra.mxu0 %v253
      %280 = vmatprep.subr.mxu0 0.0
      %281 = vmatpush1.msra.mxu0 %v254
      %282 = vmatprep.subr.mxu0 0.0
      %283 = vmatpush1.msra.mxu0 %v255
      %284 = vmatprep.subr.mxu0 0.0
      %285 = vmatpush1.msra.mxu0 0.0
      %286 = vmatprep.subr.mxu0 0.0
      %287 = vmatpush1.msra.mxu0 0.0
      %288 = vmatprep.subr.mxu0 0.0
      %289 = vmatpush1.msra.mxu0 0.0
      %290 = vmatprep.subr.mxu0 0.0
      %291 = vmatpush1.msra.mxu0 0.0
      %292 = vmatprep.subr.mxu0 0.0
      %293 = vmatpush1.msra.mxu0 0.0
      %294 = vmatprep.subr.mxu0 0.0
      %295 = vmatpush1.msra.mxu0 0.0
      %296 = vmatprep.subr.mxu0 0.0
      %297 = vmatpush1.msra.mxu0 0.0
      %298 = vmatprep.subr.mxu0 0.0
      %299 = vmatpush1.msra.mxu0 0.0
      %300 = vmatprep.subr.mxu0 0.0
      %301 = vmatpush1.msra.mxu0 0.0
      %302 = vmatprep.subr.mxu0 0.0
      %303 = vmatpush1.msra.mxu0 0.0
      %304 = vmatprep.subr.mxu0 0.0
      %305 = vmatpush1.msra.mxu0 0.0
      %306 = vmatprep.subr.mxu0 0.0
      %307 = vmatpush1.msra.mxu0 0.0
      %308 = vmatprep.subr.mxu0 0.0
      %309 = vmatpush1.msra.mxu0 0.0
      %310 = vmatprep.subr.mxu0 0.0
      %311 = vmatpush1.msra.mxu0 0.0
      %312 = vmatprep.subr.mxu0 0.0
      %313 = vmatpush1.msra.mxu0 0.0
      %314 = vmatprep.subr.mxu0 0.0
      %315 = vmatpush1.msra.mxu0 0.0
      %316 = vmatprep.subr.mxu0 0.0
      %317 = vmatpush1.msra.mxu0 0.0
      %318 = vmatprep.subr.mxu0 0.0
      %319 = vmatpush1.msra.mxu0 0.0
      %320 = vmatprep.subr.mxu0 0.0
      %321 = vmatpush1.msra.mxu0 0.0
      %322 = vmatprep.subr.mxu0 0.0
      %323 = vmatpush1.msra.mxu0 0.0
      %324 = vmatprep.subr.mxu0 0.0
      %325 = vmatpush1.msra.mxu0 0.0
      %326 = vmatprep.subr.mxu0 0.0
      %327 = vmatpush1.msra.mxu0 0.0
      %328 = vmatprep.subr.mxu0 0.0
      %329 = vmatpush1.msra.mxu0 0.0
      %330 = vmatprep.subr.mxu0 0.0
      %331 = vmatpush1.msra.mxu0 0.0
      %332 = vmatprep.subr.mxu0 0.0
      %333 = vmatpush1.msra.mxu0 0.0
      %334 = vmatprep.subr.mxu0 0.0
      %335 = vmatpush1.msra.mxu0 0.0
      %336 = vmatprep.subr.mxu0 0.0
      %337 = vmatpush1.msra.mxu0 0.0
      %338 = vmatprep.subr.mxu0 0.0
      %339 = vmatpush1.msra.mxu0 0.0
      %340 = vmatprep.mubr.f32.mxu0 0.0
      %341 = vmatmul.mubr.f32.gmra.mrb[0].mxu0 %v265
      %v342 = vpop.f32.mrb[0].mxu0
      %v343 = vadd.f32 %v261, %v342
      %v344 = vpop.f32.mrb[0].mxu0
      %345 = vmatprep.mubr.f32.mxu0 0.0
      %346 = vmatmul.mubr.f32.gmra.mrb[0].mxu0 %v268
      %v347 = vpop.f32.mrb[0].mxu0
      %v348 = vadd.f32 %v261, %v347
      %v349 = vpop.f32.mrb[0].mxu0
      %350 = vmatprep.mubr.f32.mxu0 0.0
      %351 = vmatmul.mubr.f32.gmra.mrb[0].mxu0 %v271
      %v352 = vpop.f32.mrb[0].mxu0
      %v353 = vadd.f32 %v261, %v352
      %v354 = vpop.f32.mrb[0].mxu0
      %355 = vmatprep.mubr.f32.mxu0 0.0
      %356 = vmatmul.mubr.f32.gmra.mrb[0].mxu0 %v274
      %v357 = vpop.f32.mrb[0].mxu0
      %v358 = vadd.f32 %v261, %v357
      %v359 = vpop.f32.mrb[0].mxu0
      %360 = vdwg.mxu0
      %361 = vst [vmem:[#allocation2] sm:$0xff] %v343
      %362 = vst [vmem:[#allocation2 + $0x8] sm:$0xff] %v348
      %363 = vst [vmem:[#allocation2 + $0x10] sm:$0xff] %v353
      %364 = vst [vmem:[#allocation2 + $0x18] sm:$0xff] %v358
      %v365 = vld [vmem:[#allocation3] sm:$0xff]
      %v366 = vld [vmem:[#allocation4] sm:$0xff]
      %v367 = vld [vmem:[%s2] sm:$0xff]
      %v368 = vld [vmem:[%s2 + $0x8] sm:$0xff]
      %v369 = vld [vmem:[%s2 + $0x10] sm:$0xff]
      %v370 = vld [vmem:[%s2 + $0x18] sm:$0xff]
      %v371 = vld [vmem:[#allocation2] sm:$0xff]
      %v373 = vsel %vm263, %v365, 0
      %375 = vmatprep.subr.mxu0 0.0
      %376 = vmatpush1.msra.mxu0 %v367
      %377 = vmatprep.subr.mxu0 0.0
      %378 = vmatpush1.msra.mxu0 %v368
      %379 = vmatprep.subr.mxu0 0.0
      %380 = vmatpush1.msra.mxu0 %v369
      %381 = vmatprep.subr.mxu0 0.0
      %382 = vmatpush1.msra.mxu0 %v370
      %383 = vmatprep.subr.mxu0 0.0
      %384 = vmatpush1.msra.mxu0 0.0
      %385 = vmatprep.subr.mxu0 0.0
      %386 = vmatpush1.msra.mxu0 0.0
      %387 = vmatprep.subr.mxu0 0.0
      %388 = vmatpush1.msra.mxu0 0.0
      %389 = vmatprep.subr.mxu0 0.0
      %390 = vmatpush1.msra.mxu0 0.0
      %391 = vmatprep.subr.mxu0 0.0
      %392 = vmatpush1.msra.mxu0 0.0
      %393 = vmatprep.subr.mxu0 0.0
      %394 = vmatpush1.msra.mxu0 0.0
      %395 = vmatprep.subr.mxu0 0.0
      %396 = vmatpush1.msra.mxu0 0.0
      %397 = vmatprep.subr.mxu0 0.0
      %398 = vmatpush1.msra.mxu0 0.0
      %399 = vmatprep.subr.mxu0 0.0
      %400 = vmatpush1.msra.mxu0 0.0
      %401 = vmatprep.subr.mxu0 0.0
      %402 = vmatpush1.msra.mxu0 0.0
      %403 = vmatprep.subr.mxu0 0.0
      %404 = vmatpush1.msra.mxu0 0.0
      %405 = vmatprep.subr.mxu0 0.0
      %406 = vmatpush1.msra.mxu0 0.0
      %407 = vmatprep.subr.mxu0 0.0
      %408 = vmatpush1.msra.mxu0 0.0
      %409 = vmatprep.subr.mxu0 0.0
      %410 = vmatpush1.msra.mxu0 0.0
      %411 = vmatprep.subr.mxu0 0.0
      %412 = vmatpush1.msra.mxu0 0.0
      %413 = vmatprep.subr.mxu0 0.0
      %414 = vmatpush1.msra.mxu0 0.0
      %415 = vmatprep.subr.mxu0 0.0
      %416 = vmatpush1.msra.mxu0 0.0
      %417 = vmatprep.subr.mxu0 0.0
      %418 = vmatpush1.msra.mxu0 0.0
      %419 = vmatprep.subr.mxu0 0.0
      %420 = vmatpush1.msra.mxu0 0.0
      %421 = vmatprep.subr.mxu0 0.0
      %422 = vmatpush1.msra.mxu0 0.0
      %423 = vmatprep.subr.mxu0 0.0
      %424 = vmatpush1.msra.mxu0 0.0
      %425 = vmatprep.subr.mxu0 0.0
      %426 = vmatpush1.msra.mxu0 0.0
      %427 = vmatprep.subr.mxu0 0.0
      %428 = vmatpush1.msra.mxu0 0.0
      %429 = vmatprep.subr.mxu0 0.0
      %430 = vmatpush1.msra.mxu0 0.0
      %431 = vmatprep.subr.mxu0 0.0
      %432 = vmatpush1.msra.mxu0 0.0
      %433 = vmatprep.subr.mxu0 0.0
      %434 = vmatpush1.msra.mxu0 0.0
      %435 = vmatprep.subr.mxu0 0.0
      %436 = vmatpush1.msra.mxu0 0.0
      %437 = vmatprep.subr.mxu0 0.0
      %438 = vmatpush1.msra.mxu0 0.0
      %439 = vmatprep.mubr.f32.mxu0 0.0
      %440 = vmatmul.mubr.f32.gmra.mrb[0].mxu0 %v373
      %v441 = vpop.f32.mrb[0].mxu0
      %v442 = vadd.f32 %v371, %v441
      %v443 = vpop.f32.mrb[0].mxu0
      %444 = vdwg.mxu0
      %v445 = vxor.u32 %v442, 2147483648
      %v446 = vmul.f32 %v445, 1.442695
      %v447 = vpow.pop %v446
      %v448 = vadd.f32 %v447, 1.0
      %v449 = vrcp.pop %v448
      %v450 = vmul.f32 1.0, %v449
      %v451 = vtanh.pop %v442
      %453 = vrot.lane.b32.xlu0 %v366, 32
      %v454 = vpop.permute.xlu0 %453
      %v456 = vmul.f32 %v450, %v454
      %458 = vrot.lane.b32.xlu0 %v451, 64
      %v459 = vpop.permute.xlu0 %458
      %v461 = vmul.f32 %v450, %v459
      %463 = vrot.lane.b32.xlu0 %v461, 32
      %v464 = vpop.permute.xlu0 %463
      %v466 = vadd.f32 %v456, %v464
      %v467 = vtanh.pop %v466
      %469 = vrot.lane.b32.xlu0 %v467, 64
      %v470 = vpop.permute.xlu0 %469
      %v472 = vmul.f32 %v450, %v470
      %s473 = scalar_lea.vmem [#allocation2], 8
      %v474 = vld [vmem:[%s473] sm:$0xff]
      %476 = vrot.lane.b32.xlu0 %v472, 32
      %v477 = vpop.permute.xlu0 %476
      %v478 = vsel %vm263, %v477, 0
      %480 = vmatprep.subr.mxu0 0.0
      %481 = vmatpush1.msra.mxu0 %v367
      %482 = vmatprep.subr.mxu0 0.0
      %483 = vmatpush1.msra.mxu0 %v368
      %484 = vmatprep.subr.mxu0 0.0
      %485 = vmatpush1.msra.mxu0 %v369
      %486 = vmatprep.subr.mxu0 0.0
      %487 = vmatpush1.msra.mxu0 %v370
      %488 = vmatprep.subr.mxu0 0.0
      %489 = vmatpush1.msra.mxu0 0.0
      %490 = vmatprep.subr.mxu0 0.0
      %491 = vmatpush1.msra.mxu0 0.0
      %492 = vmatprep.subr.mxu0 0.0
      %493 = vmatpush1.msra.mxu0 0.0
      %494 = vmatprep.subr.mxu0 0.0
      %495 = vmatpush1.msra.mxu0 0.0
      %496 = vmatprep.subr.mxu0 0.0
      %497 = vmatpush1.msra.mxu0 0.0
      %498 = vmatprep.subr.mxu0 0.0
      %499 = vmatpush1.msra.mxu0 0.0
      %500 = vmatprep.subr.mxu0 0.0
      %501 = vmatpush1.msra.mxu0 0.0
      %502 = vmatprep.subr.mxu0 0.0
      %503 = vmatpush1.msra.mxu0 0.0
      %504 = vmatprep.subr.mxu0 0.0
      %505 = vmatpush1.msra.mxu0 0.0
      %506 = vmatprep.subr.mxu0 0.0
      %507 = vmatpush1.msra.mxu0 0.0
      %508 = vmatprep.subr.mxu0 0.0
      %509 = vmatpush1.msra.mxu0 0.0
      %510 = vmatprep.subr.mxu0 0.0
      %511 = vmatpush1.msra.mxu0 0.0
      %512 = vmatprep.subr.mxu0 0.0
      %513 = vmatpush1.msra.mxu0 0.0
      %514 = vmatprep.subr.mxu0 0.0
      %515 = vmatpush1.msra.mxu0 0.0
      %516 = vmatprep.subr.mxu0 0.0
      %517 = vmatpush1.msra.mxu0 0.0
      %518 = vmatprep.subr.mxu0 0.0
      %519 = vmatpush1.msra.mxu0 0.0
      %520 = vmatprep.subr.mxu0 0.0
      %521 = vmatpush1.msra.mxu0 0.0
      %522 = vmatprep.subr.mxu0 0.0
      %523 = vmatpush1.msra.mxu0 0.0
      %524 = vmatprep.subr.mxu0 0.0
      %525 = vmatpush1.msra.mxu0 0.0
      %526 = vmatprep.subr.mxu0 0.0
      %527 = vmatpush1.msra.mxu0 0.0
      %528 = vmatprep.subr.mxu0 0.0
      %529 = vmatpush1.msra.mxu0 0.0
      %530 = vmatprep.subr.mxu0 0.0
      %531 = vmatpush1.msra.mxu0 0.0
      %532 = vmatprep.subr.mxu0 0.0
      %533 = vmatpush1.msra.mxu0 0.0
      %534 = vmatprep.subr.mxu0 0.0
      %535 = vmatpush1.msra.mxu0 0.0
      %536 = vmatprep.subr.mxu0 0.0
      %537 = vmatpush1.msra.mxu0 0.0
      %538 = vmatprep.subr.mxu0 0.0
      %539 = vmatpush1.msra.mxu0 0.0
      %540 = vmatprep.subr.mxu0 0.0
      %541 = vmatpush1.msra.mxu0 0.0
      %542 = vmatprep.subr.mxu0 0.0
      %543 = vmatpush1.msra.mxu0 0.0
      %544 = vmatprep.mubr.f32.mxu0 0.0
      %545 = vmatmul.mubr.f32.gmra.mrb[0].mxu0 %v478
      %v546 = vpop.f32.mrb[0].mxu0
      %v547 = vadd.f32 %v474, %v546
      %v548 = vpop.f32.mrb[0].mxu0
      %549 = vdwg.mxu0
      %v550 = vxor.u32 %v547, 2147483648
      %v551 = vmul.f32 %v550, 1.442695
      %v552 = vpow.pop %v551
      %v553 = vadd.f32 %v552, 1.0
      %v554 = vrcp.pop %v553
      %v555 = vmul.f32 1.0, %v554
      %v556 = vtanh.pop %v547
      %v557 = vmul.f32 %v555, %v466
      %559 = vrot.lane.b32.xlu0 %v556, 64
      %v560 = vpop.permute.xlu0 %559
      %v562 = vmul.f32 %v555, %v560
      %564 = vrot.lane.b32.xlu0 %v562, 32
      %v565 = vpop.permute.xlu0 %564
      %v567 = vadd.f32 %v557, %v565
      %v568 = vtanh.pop %v567
      %570 = vrot.lane.b32.xlu0 %v568, 64
      %v571 = vpop.permute.xlu0 %570
      %v573 = vmul.f32 %v555, %v571
      %s574 = scalar_lea.vmem [#allocation2], 16
      %v575 = vld [vmem:[%s574] sm:$0xff]
      %577 = vrot.lane.b32.xlu0 %v573, 32
      %v578 = vpop.permute.xlu0 %577
      %v579 = vsel %vm263, %v578, 0
      %581 = vmatprep.subr.mxu0 0.0
      %582 = vmatpush1.msra.mxu0 %v367
      %583 = vmatprep.subr.mxu0 0.0
      %584 = vmatpush1.msra.mxu0 %v368
      %585 = vmatprep.subr.mxu0 0.0
      %586 = vmatpush1.msra.mxu0 %v369
      %587 = vmatprep.subr.mxu0 0.0
      %588 = vmatpush1.msra.mxu0 %v370
      %589 = vmatprep.subr.mxu0 0.0
      %590 = vmatpush1.msra.mxu0 0.0
      %591 = vmatprep.subr.mxu0 0.0
      %592 = vmatpush1.msra.mxu0 0.0
      %593 = vmatprep.subr.mxu0 0.0
      %594 = vmatpush1.msra.mxu0 0.0
      %595 = vmatprep.subr.mxu0 0.0
      %596 = vmatpush1.msra.mxu0 0.0
      %597 = vmatprep.subr.mxu0 0.0
      %598 = vmatpush1.msra.mxu0 0.0
      %599 = vmatprep.subr.mxu0 0.0
      %600 = vmatpush1.msra.mxu0 0.0
      %601 = vmatprep.subr.mxu0 0.0
      %602 = vmatpush1.msra.mxu0 0.0
      %603 = vmatprep.subr.mxu0 0.0
      %604 = vmatpush1.msra.mxu0 0.0
      %605 = vmatprep.subr.mxu0 0.0
      %606 = vmatpush1.msra.mxu0 0.0
      %607 = vmatprep.subr.mxu0 0.0
      %608 = vmatpush1.msra.mxu0 0.0
      %609 = vmatprep.subr.mxu0 0.0
      %610 = vmatpush1.msra.mxu0 0.0
      %611 = vmatprep.subr.mxu0 0.0
      %612 = vmatpush1.msra.mxu0 0.0
      %613 = vmatprep.subr.mxu0 0.0
      %614 = vmatpush1.msra.mxu0 0.0
      %615 = vmatprep.subr.mxu0 0.0
      %616 = vmatpush1.msra.mxu0 0.0
      %617 = vmatprep.subr.mxu0 0.0
      %618 = vmatpush1.msra.mxu0 0.0
      %619 = vmatprep.subr.mxu0 0.0
      %620 = vmatpush1.msra.mxu0 0.0
      %621 = vmatprep.subr.mxu0 0.0
      %622 = vmatpush1.msra.mxu0 0.0
      %623 = vmatprep.subr.mxu0 0.0
      %624 = vmatpush1.msra.mxu0 0.0
      %625 = vmatprep.subr.mxu0 0.0
      %626 = vmatpush1.msra.mxu0 0.0
      %627 = vmatprep.subr.mxu0 0.0
      %628 = vmatpush1.msra.mxu0 0.0
      %629 = vmatprep.subr.mxu0 0.0
      %630 = vmatpush1.msra.mxu0 0.0
      %631 = vmatprep.subr.mxu0 0.0
      %632 = vmatpush1.msra.mxu0 0.0
      %633 = vmatprep.subr.mxu0 0.0
      %634 = vmatpush1.msra.mxu0 0.0
      %635 = vmatprep.subr.mxu0 0.0
      %636 = vmatpush1.msra.mxu0 0.0
      %637 = vmatprep.subr.mxu0 0.0
      %638 = vmatpush1.msra.mxu0 0.0
      %639 = vmatprep.subr.mxu0 0.0
      %640 = vmatpush1.msra.mxu0 0.0
      %641 = vmatprep.subr.mxu0 0.0
      %642 = vmatpush1.msra.mxu0 0.0
      %643 = vmatprep.subr.mxu0 0.0
      %644 = vmatpush1.msra.mxu0 0.0
      %645 = vmatprep.mubr.f32.mxu0 0.0
      %646 = vmatmul.mubr.f32.gmra.mrb[0].mxu0 %v579
      %v647 = vpop.f32.mrb[0].mxu0
      %v648 = vadd.f32 %v575, %v647
      %v649 = vpop.f32.mrb[0].mxu0
      %650 = vdwg.mxu0
      %v651 = vxor.u32 %v648, 2147483648
      %v652 = vmul.f32 %v651, 1.442695
      %v653 = vpow.pop %v652
      %v654 = vadd.f32 %v653, 1.0
      %v655 = vrcp.pop %v654
      %v656 = vmul.f32 1.0, %v655
      %v657 = vtanh.pop %v648
      %v658 = vmul.f32 %v656, %v567
      %660 = vrot.lane.b32.xlu0 %v657, 64
      %v661 = vpop.permute.xlu0 %660
      %v663 = vmul.f32 %v656, %v661
      %665 = vrot.lane.b32.xlu0 %v663, 32
      %v666 = vpop.permute.xlu0 %665
      %v668 = vadd.f32 %v658, %v666
      %v669 = vtanh.pop %v668
      %671 = vrot.lane.b32.xlu0 %v669, 64
      %v672 = vpop.permute.xlu0 %671
      %v674 = vmul.f32 %v656, %v672
      %s675 = scalar_lea.vmem [#allocation2], 24
      %v676 = vld [vmem:[%s675] sm:$0xff]
      %678 = vrot.lane.b32.xlu0 %v674, 32
      %v679 = vpop.permute.xlu0 %678
      %v680 = vsel %vm263, %v679, 0
      %682 = vmatprep.subr.mxu0 0.0
      %683 = vmatpush1.msra.mxu0 %v367
      %684 = vmatprep.subr.mxu0 0.0
      %685 = vmatpush1.msra.mxu0 %v368
      %686 = vmatprep.subr.mxu0 0.0
      %687 = vmatpush1.msra.mxu0 %v369
      %688 = vmatprep.subr.mxu0 0.0
      %689 = vmatpush1.msra.mxu0 %v370
      %690 = vmatprep.subr.mxu0 0.0
      %691 = vmatpush1.msra.mxu0 0.0
      %692 = vmatprep.subr.mxu0 0.0
      %693 = vmatpush1.msra.mxu0 0.0
      %694 = vmatprep.subr.mxu0 0.0
      %695 = vmatpush1.msra.mxu0 0.0
      %696 = vmatprep.subr.mxu0 0.0
      %697 = vmatpush1.msra.mxu0 0.0
      %698 = vmatprep.subr.mxu0 0.0
      %699 = vmatpush1.msra.mxu0 0.0
      %700 = vmatprep.subr.mxu0 0.0
      %701 = vmatpush1.msra.mxu0 0.0
      %702 = vmatprep.subr.mxu0 0.0
      %703 = vmatpush1.msra.mxu0 0.0
      %704 = vmatprep.subr.mxu0 0.0
      %705 = vmatpush1.msra.mxu0 0.0
      %706 = vmatprep.subr.mxu0 0.0
      %707 = vmatpush1.msra.mxu0 0.0
      %708 = vmatprep.subr.mxu0 0.0
      %709 = vmatpush1.msra.mxu0 0.0
      %710 = vmatprep.subr.mxu0 0.0
      %711 = vmatpush1.msra.mxu0 0.0
      %712 = vmatprep.subr.mxu0 0.0
      %713 = vmatpush1.msra.mxu0 0.0
      %714 = vmatprep.subr.mxu0 0.0
      %715 = vmatpush1.msra.mxu0 0.0
      %716 = vmatprep.subr.mxu0 0.0
      %717 = vmatpush1.msra.mxu0 0.0
      %718 = vmatprep.subr.mxu0 0.0
      %719 = vmatpush1.msra.mxu0 0.0
      %720 = vmatprep.subr.mxu0 0.0
      %721 = vmatpush1.msra.mxu0 0.0
      %722 = vmatprep.subr.mxu0 0.0
      %723 = vmatpush1.msra.mxu0 0.0
      %724 = vmatprep.subr.mxu0 0.0
      %725 = vmatpush1.msra.mxu0 0.0
      %726 = vmatprep.subr.mxu0 0.0
      %727 = vmatpush1.msra.mxu0 0.0
      %728 = vmatprep.subr.mxu0 0.0
      %729 = vmatpush1.msra.mxu0 0.0
      %730 = vmatprep.subr.mxu0 0.0
      %731 = vmatpush1.msra.mxu0 0.0
      %732 = vmatprep.subr.mxu0 0.0
      %733 = vmatpush1.msra.mxu0 0.0
      %734 = vmatprep.subr.mxu0 0.0
      %735 = vmatpush1.msra.mxu0 0.0
      %736 = vmatprep.subr.mxu0 0.0
      %737 = vmatpush1.msra.mxu0 0.0
      %738 = vmatprep.subr.mxu0 0.0
      %739 = vmatpush1.msra.mxu0 0.0
      %740 = vmatprep.subr.mxu0 0.0
      %741 = vmatpush1.msra.mxu0 0.0
      %742 = vmatprep.subr.mxu0 0.0
      %743 = vmatpush1.msra.mxu0 0.0
      %744 = vmatprep.subr.mxu0 0.0
      %745 = vmatpush1.msra.mxu0 0.0
      %746 = vmatprep.mubr.f32.mxu0 0.0
      %747 = vmatmul.mubr.f32.gmra.mrb[0].mxu0 %v680
      %v748 = vpop.f32.mrb[0].mxu0
      %v749 = vadd.f32 %v676, %v748
      %v750 = vpop.f32.mrb[0].mxu0
      %751 = vdwg.mxu0
      %v752 = vxor.u32 %v749, 2147483648
      %v753 = vmul.f32 %v752, 1.442695
      %v754 = vpow.pop %v753
      %v755 = vadd.f32 %v754, 1.0
      %v756 = vrcp.pop %v755
      %v757 = vmul.f32 1.0, %v756
      %v758 = vtanh.pop %v749
      %v759 = vmul.f32 %v757, %v668
      %761 = vrot.lane.b32.xlu0 %v758, 64
      %v762 = vpop.permute.xlu0 %761
      %v764 = vmul.f32 %v757, %v762
      %766 = vrot.lane.b32.xlu0 %v764, 32
      %v767 = vpop.permute.xlu0 %766
      %v769 = vadd.f32 %v759, %v767
      %v770 = vtanh.pop %v769
      %772 = vrot.lane.b32.xlu0 %v770, 64
      %v773 = vpop.permute.xlu0 %772
      %v775 = vmul.f32 %v757, %v773
      %777 = vrot.lane.b32.xlu0 %v775, 32
      %v778 = vpop.permute.xlu0 %777
      %780 = vst.msk [vmem:[#allocation3] sm:$0xff] %vm263, %v778
      %782 = vrot.lane.b32.xlu0 %v769, 96
      %v783 = vpop.permute.xlu0 %782
      %785 = vst.msk [vmem:[#allocation4] sm:$0xff] %vm263, %v783
      %p786 = scmp.eq.s32.totalorder %s19, 1
      // Predicated region
      $region49: #{lstm_forward.1} parent=43 // pred_check
        %p787 = pneg %p786
      $region50: #{lstm_forward.1} parent=43 // pred_check_branch
        %789 = sbr.rel (%p787) target = $region52
      $region51: #{lstm_forward.1} parent=43 // pred_region
        %v790 = vld [vmem:[%s4] sm:$0x1]
        %v792 = vlaneseq
        %v793 = vshrl.u32 %v792, 7
        %v794 = vsub.s32 0, %v793
        %v795 = vrot.slane %v790, %v794
        %796 = vrot.lane.b32.xlu0 %v795, 96
        %v797 = vpop.permute.xlu0 %796
        %v799 = vmul.f32 %v775, %v797
        %801 = vrot.lane.b32.xlu0 %v799, 32
        %v802 = vpop.permute.xlu0 %801
        %v804 = vsel %vm263, %v802, 0.0
        %805 = vadd.xlane.f32.xlu0 %v804
        %v806 = vpop.xlane.xlu0 %805
        %v807 = vld [vmem:[#allocation5] sm:$0x1]
        %v809 = vlaneseq
        %v810 = vshrl.u32 %v809, 7
        %v811 = vsub.s32 0, %v810
        %v812 = vrot.slane %v807, %v811
        %v814 = vadd.f32 %v806, %v812
        %vm815 = vcmask 7168
        %816 = vst.msk [vmem:[%s6] sm:$0xff] %vm815, %v814
      $region52: #{lstm_forward.1} parent=43 // pred_fallthru
        _
      // Predicated region
      $region53: #{lstm_forward.1} parent=43 // pred_check
        %p817 = pneg %p163
      $region54: #{lstm_forward.1} parent=43 // pred_check_branch
        %819 = sbr.rel (%p817) target = $region56
      $region55: #{lstm_forward.1} parent=43 // pred_region
        _
      $region56: #{lstm_forward.1} parent=43 // pred_fallthru
        _
      // Predicated region
      $region57: #{lstm_forward.1} parent=43 // pred_check
        %p820 = pneg %p163
      $region58: #{lstm_forward.1} parent=43 // pred_check_branch
        %822 = sbr.rel (%p820) target = $region60
      $region59: #{lstm_forward.1} parent=43 // pred_region
        _
      $region60: #{lstm_forward.1} parent=43 // pred_fallthru
        _
    $region44: #{lstm_forward.1} parent=5 // pred_fallthru
      _
    %p823 = scmp.le.s32.totalorder 2, %s14
    // Predicated region
    $region61: #{lstm_forward.1} parent=5 // pred_check
      %p824 = pneg %p823
    $region62: #{lstm_forward.1} parent=5 // pred_check_branch
      %826 = sbr.rel (%p824) target = $region64
    $region63: #{lstm_forward.1} parent=5 // pred_region
      %s827 = ssub.s32 %s14, 2
    $region64: #{lstm_forward.1} parent=5 // pred_fallthru
      _
  $region6: #{lstm_forward.1} parent=0 // loop_footer
    %s18 = sadd.s32 1, %s14
  $region7: #{lstm_forward.1} parent=0 // loop_footer_branch
    %13 = sbr.rel target = $region3
  $region8: #{lstm_forward.1} parent=0 // loop_exit
    _

</llo_original>
